<compile_context>
chip_gen: v7x
topology: tpu7x:2x2x1
jax: 0.10.0
libtpu: 0.0.40
codegen_flags: <defaults>
</compile_context>

<pallas_src>
import jax
import jax.numpy as jnp
from jax.experimental import pallas as pl
from jax.experimental.pallas import tpu as pltpu  # noqa: F401  (TPU backend module)

INPUT_DIM = 4   # deterministic stand-in for `m = random.choice([4, 5, 3, 6])`
BATCH = 8       # the "batch_size" axis of the 2-D input
LANE = 128      # TPU vreg lane width — feature dim is padded up to this


def _self_attention_kernel(x_ref, w_ref, b_ref, o_ref):
    """Single grid step over ALL instances.

    x_ref : [N, B, D]   activations (D = true feature dim, unpadded)
    w_ref : [D, 3*Dp]   fused, pre-transposed, lane-padded [Wk^T | Wq^T*s | Wv^T]
    b_ref : [1, 3*Dp]   fused, lane-padded [bk | bq*s | bv]
    o_ref : [N, B, Dp]  lane-dense (128-padded) output
    """
    x = x_ref[...]                                   # [N, B, D]
    n, bsz, d = x.shape
    dp = o_ref.shape[-1]

    # One fused projection for every instance/row at once:
    # [N*B, D] @ [D, 3*Dp] -> [N*B, 3*Dp]  (single MXU contraction over D).
    # The reshapes only merge/split leading dims (last dim untouched) -> cheap.
    x2 = x.reshape(n * bsz, d)
    kqv2 = jnp.dot(x2, w_ref[...], preferred_element_type=jnp.float32) + b_ref[...]
    kqv = kqv2.reshape(n, bsz, 3 * dp)

    # Lane-aligned split: offsets 0 / Dp / 2*Dp are multiples of 128 (vreg
    # boundaries), so no intra-vreg lane gathers are needed.
    k = kqv[:, :, :dp]
    q = kqv[:, :, dp:2 * dp]                         # 1/sqrt(D) already folded in
    v = kqv[:, :, 2 * dp:]

    # scores = q @ k^T per instance; padded columns of q/k are zero -> exact.
    scores = jnp.einsum('nqd,nkd->nqk', q, k,
                        preferred_element_type=jnp.float32)       # [N, B, B]

    # Numerically-stable softmax over the key axis.
    m = jnp.max(scores, axis=-1, keepdims=True)
    e = jnp.exp(scores - m)
    denom = jnp.sum(e, axis=-1, keepdims=True)
    attn = e * pl.reciprocal(denom, approx=False)    # exact path for the 1e-5 check

    # [N, B, B] . [N, B, Dp] -> [N, B, Dp]; full-width (128-lane) unmasked store.
    o_ref[...] = jnp.einsum('nqk,nkd->nqd', attn, v,
                            preferred_element_type=jnp.float32)


def self_attention_batched(xs, wk, bk, wq, bq, wv, bv):
    """xs: [N, B, D] — N independent attention instances, one pallas_call, one grid step.

    Weights follow the nn.Linear [out_features, in_features] convention and are
    pre-transposed, scale-folded (Q), zero-padded to the lane width, and fused
    on the host so the kernel sees a single [D, 3*Dp] slab + [1, 3*Dp] bias.
    """
    N, B, D = xs.shape
    Dp = max(LANE, ((D + LANE - 1) // LANE) * LANE)
    scale = 1.0 / (float(D) ** 0.5)

    def pad_w(w_t):                                   # [D, D] -> [D, Dp]
        return jnp.pad(w_t, ((0, 0), (0, Dp - D)))

    def pad_b(b):                                     # [D] -> [Dp]
        return jnp.pad(b, (0, Dp - D))

    w_kqv = jnp.concatenate(
        [pad_w(wk.T), pad_w(wq.T * scale), pad_w(wv.T)], axis=1)        # [D, 3*Dp]
    b_kqv = jnp.concatenate(
        [pad_b(bk), pad_b(bq * scale), pad_b(bv)]).reshape(1, 3 * Dp)   # [1, 3*Dp]

    out_padded = pl.pallas_call(
        _self_attention_kernel,
        out_shape=jax.ShapeDtypeStruct((N, B, Dp), jnp.float32),
        grid=(1,),                                    # collapsed: one step for all N
        in_specs=[
            pl.BlockSpec((N, B, D), lambda i: (0, 0, 0)),       # all instances at once
            pl.BlockSpec((D, 3 * Dp), lambda i: (0, 0)),        # fused padded weights
            pl.BlockSpec((1, 3 * Dp), lambda i: (0, 0)),        # fused padded bias
        ],
        out_specs=pl.BlockSpec((N, B, Dp), lambda i: (0, 0, 0)),
    )(xs, w_kqv, b_kqv)

    return out_padded[:, :, :D]                        # drop lane padding (host-side)


def self_attention(x, wk, bk, wq, bq, wv, bv):
    """Faithful to the PyTorch module's forward: x is a 2-D [batch, feature_dim]."""
    return self_attention_batched(x[None], wk, bk, wq, bq, wv, bv)[0]


def _reference(x, wk, bk, wq, bq, wv, bv):
    k = x @ wk.T + bk
    q = x @ wq.T + bq
    v = x @ wv.T + bv
    scores = (q @ k.T) / jnp.sqrt(jnp.float32(x.shape[1]))
    attn = jax.nn.softmax(scores, axis=-1)
    return attn @ v


if __name__ == "__main__":
    key = jax.random.PRNGKey(0)
    kx, kwk, kbk, kwq, kbq, kwv, kbv, kxs = jax.random.split(key, 8)

    D = INPUT_DIM
    B = BATCH
    bound = 1.0 / jnp.sqrt(jnp.float32(D))    # nn.Linear default init range
    x = jax.random.normal(kx, (B, D), dtype=jnp.float32)
    wk = jax.random.uniform(kwk, (D, D), jnp.float32, -bound, bound)
    bk = jax.random.uniform(kbk, (D,), jnp.float32, -bound, bound)
    wq = jax.random.uniform(kwq, (D, D), jnp.float32, -bound, bound)
    bq = jax.random.uniform(kbq, (D,), jnp.float32, -bound, bound)
    wv = jax.random.uniform(kwv, (D, D), jnp.float32, -bound, bound)
    bv = jax.random.uniform(kbv, (D,), jnp.float32, -bound, bound)

    # Single-instance path (matches the PyTorch module's forward exactly).
    out = jax.block_until_ready(self_attention(x, wk, bk, wq, bq, wv, bv))
    ref = jax.block_until_ready(_reference(x, wk, bk, wq, bq, wv, bv))
    assert out.shape == (B, D)
    assert jnp.allclose(out, ref, atol=1e-5, rtol=1e-5)

    # Batched path: N independent instances, still ONE pallas_call / grid step.
    N = 4
    xs = jax.random.normal(kxs, (N, B, D), dtype=jnp.float32)
    outs = jax.block_until_ready(self_attention_batched(xs, wk, bk, wq, bq, wv, bv))
    refs = jax.vmap(lambda xi: _reference(xi, wk, bk, wq, bq, wv, bv))(xs)
    assert outs.shape == (N, B, D)
    assert jnp.allclose(outs, refs, atol=1e-5, rtol=1e-5)

    print("KERNEL_OK")
</pallas_src>

<mosaic_0001>
module attributes {stable_mosaic.version = 11 : i64} {
  func.func @_self_attention_kernel(%arg0: i32, %arg1: memref<1x8x4xf32, #tpu.memory_space<vmem>>, %arg2: memref<4x384xf32, #tpu.memory_space<vmem>>, %arg3: memref<1x384xf32, #tpu.memory_space<vmem>>, %arg4: memref<1x8x128xf32, #tpu.memory_space<vmem>>) attributes {dimension_semantics = [#tpu.dimension_semantics<arbitrary>], iteration_bounds = array<i64: 1>, scalar_prefetch = 0 : i64, scratch_operands = 0 : i64, tpu.core_type = #tpu.core_type<tc>, window_params = [{pipeline_mode = #tpu.pipeline_mode<synchronous>, transform_indices = @transform_0, window_bounds = array<i64: 1, 8, 4>}, {pipeline_mode = #tpu.pipeline_mode<synchronous>, transform_indices = @transform_1, window_bounds = array<i64: 4, 384>}, {pipeline_mode = #tpu.pipeline_mode<synchronous>, transform_indices = @transform_2, window_bounds = array<i64: 1, 384>}, {pipeline_mode = #tpu.pipeline_mode<synchronous>, transform_indices = @transform_3, window_bounds = array<i64: 1, 8, 128>}]} {
    %c0 = arith.constant 0 : index
    %c0_0 = arith.constant 0 : index
    %c0_1 = arith.constant 0 : index
    %0 = vector.load %arg1[%c0, %c0_0, %c0_1] : memref<1x8x4xf32, #tpu.memory_space<vmem>>, vector<1x8x4xf32>
    %1 = vector.shape_cast %0 : vector<1x8x4xf32> to vector<8x4xf32>
    %c0_2 = arith.constant 0 : index
    %c0_3 = arith.constant 0 : index
    %2 = vector.load %arg2[%c0_2, %c0_3] : memref<4x384xf32, #tpu.memory_space<vmem>>, vector<4x384xf32>
    %cst = arith.constant dense<0.000000e+00> : vector<8x384xf32>
    %3 = tpu.matmul %1, %2, %cst {dimension_numbers = #tpu.dot_dimension_numbers<[1], [0], [0], [1], [0, 0, 1, 1], [], []>} : vector<8x4xf32>, vector<4x384xf32>, vector<8x384xf32> -> vector<8x384xf32>
    %c0_4 = arith.constant 0 : index
    %c0_5 = arith.constant 0 : index
    %4 = vector.load %arg3[%c0_4, %c0_5] : memref<1x384xf32, #tpu.memory_space<vmem>>, vector<1x384xf32>
    %5 = vector.broadcast %4 : vector<1x384xf32> to vector<8x384xf32>
    %6 = arith.addf %3, %5 : vector<8x384xf32>
    %7 = vector.shape_cast %6 : vector<8x384xf32> to vector<1x8x384xf32>
    %8 = vector.extract_strided_slice %7 {offsets = [0, 0, 0], sizes = [1, 8, 128], strides = [1, 1, 1]} : vector<1x8x384xf32> to vector<1x8x128xf32>
    %9 = vector.extract_strided_slice %7 {offsets = [0, 0, 128], sizes = [1, 8, 128], strides = [1, 1, 1]} : vector<1x8x384xf32> to vector<1x8x128xf32>
    %10 = vector.extract_strided_slice %7 {offsets = [0, 0, 256], sizes = [1, 8, 128], strides = [1, 1, 1]} : vector<1x8x384xf32> to vector<1x8x128xf32>
    "tpu.trace_start"() <{level = 10 : i32, message = "nqd,nkd->nqk"}> : () -> ()
    %cst_6 = arith.constant dense<0.000000e+00> : vector<1x8x8xf32>
    %11 = tpu.matmul %9, %8, %cst_6 {dimension_numbers = #tpu.dot_dimension_numbers<[2], [2], [1], [1], [0, 0, 0, 1, 1, 1], [0], [0]>} : vector<1x8x128xf32>, vector<1x8x128xf32>, vector<1x8x8xf32> -> vector<1x8x8xf32>
    "tpu.trace_stop"() : () -> ()
    %cst_7 = arith.constant dense<0xFF800000> : vector<1x8xf32>
    %12 = vector.multi_reduction <maximumf>, %11, %cst_7 [2] : vector<1x8x8xf32> to vector<1x8xf32>
    %13 = vector.shape_cast %12 : vector<1x8xf32> to vector<1x8x1xf32>
    %14 = vector.broadcast %13 : vector<1x8x1xf32> to vector<1x8x8xf32>
    %15 = arith.subf %11, %14 : vector<1x8x8xf32>
    %16 = math.exp %15 : vector<1x8x8xf32>
    %cst_8 = arith.constant dense<0.000000e+00> : vector<1x8xf32>
    %17 = vector.multi_reduction <add>, %16, %cst_8 [2] : vector<1x8x8xf32> to vector<1x8xf32>
    %18 = vector.shape_cast %17 : vector<1x8xf32> to vector<1x8x1xf32>
    %19 = tpu.reciprocal %18 : vector<1x8x1xf32> -> vector<1x8x1xf32>
    %20 = vector.broadcast %19 : vector<1x8x1xf32> to vector<1x8x8xf32>
    %21 = arith.mulf %16, %20 : vector<1x8x8xf32>
    "tpu.trace_start"() <{level = 10 : i32, message = "nqk,nkd->nqd"}> : () -> ()
    %cst_9 = arith.constant dense<0.000000e+00> : vector<1x8x128xf32>
    %22 = tpu.matmul %21, %10, %cst_9 {dimension_numbers = #tpu.dot_dimension_numbers<[2], [1], [1], [2], [0, 0, 0, 1, 1, 2], [0], [0]>} : vector<1x8x8xf32>, vector<1x8x128xf32>, vector<1x8x128xf32> -> vector<1x8x128xf32>
    "tpu.trace_stop"() : () -> ()
    %c0_10 = arith.constant 0 : index
    %c0_11 = arith.constant 0 : index
    %c0_12 = arith.constant 0 : index
    %23 = vector.load %arg4[%c0_10, %c0_11, %c0_12] : memref<1x8x128xf32, #tpu.memory_space<vmem>>, vector<1x8x128xf32>
    tpu.vector_store %arg4[%c0_10, %c0_11, %c0_12], %22 {strides = array<i32>} : memref<1x8x128xf32, #tpu.memory_space<vmem>>, vector<1x8x128xf32>,
    return
  }
  func.func @transform_0(%arg0: i32) -> (i32, i32, i32) {
    %c0_i32 = arith.constant 0 : i32
    %c0_i32_0 = arith.constant 0 : i32
    %c0_i32_1 = arith.constant 0 : i32
    %c0_i32_2 = arith.constant 0 : i32
    return %c0_i32, %c0_i32_0, %c0_i32_1 : i32, i32, i32
  }
  func.func @transform_1(%arg0: i32) -> (i32, i32) {
    %c0_i32 = arith.constant 0 : i32
    %c0_i32_0 = arith.constant 0 : i32
    %c0_i32_1 = arith.constant 0 : i32
    return %c0_i32, %c0_i32_0 : i32, i32
  }
  func.func @transform_2(%arg0: i32) -> (i32, i32) {
    %c0_i32 = arith.constant 0 : i32
    %c0_i32_0 = arith.constant 0 : i32
    %c0_i32_1 = arith.constant 0 : i32
    return %c0_i32, %c0_i32_0 : i32, i32
  }
  func.func @transform_3(%arg0: i32) -> (i32, i32, i32) {
    %c0_i32 = arith.constant 0 : i32
    %c0_i32_0 = arith.constant 0 : i32
    %c0_i32_1 = arith.constant 0 : i32
    %c0_i32_2 = arith.constant 0 : i32
    return %c0_i32, %c0_i32_0, %c0_i32_1 : i32, i32, i32
  }
}

</mosaic_0001>

<llo_original>
// kernel: tpu_custom_call.1
$region0: #{tpu_custom_call.1}
  #allocation0 [shape = 'u32[]', space=smem, size = 0x4, offset = 0x4, fixed_abs, tag = 'smem constant byte address 0x4 - core index']
  #allocation1 [shape = 'u32[144,128]{1,0:T(1,128)}', space=vmem, size = 0x12000, scoped, tag = 'internal scratch']
  %s0 = inlined_call_operand.vmem [shape: f32[1,8,4], index: 0, kind: input, shape index: {}]
  %s1 = inlined_call_operand.vmem [shape: f32[4,384], index: 1, kind: input, shape index: {}]
  %s2 = inlined_call_operand.vmem [shape: f32[1,384], index: 2, kind: input, shape index: {}]
  %s3 = inlined_call_operand.hbm [shape: f32[1,8,128], index: 3, kind: output, shape index: {}]
  %s4 = sld [smem:[#allocation0]]
  $region22: #{tpu_custom_call.1} parent=0
    _
  %s6 = ssub.s32 1, %s4
  %s7 = scalar_select 0, %s6, %s4
  $region1: #{tpu_custom_call.1} parent=0
    #allocation2 [shape = 'u8[4096]{0}', space=vmem, size = 0x1000, scoped, tag = 'output window, operand 0, single buffered']
    #allocation3 [shape = 's32[1]{0}', space=sflag, size = 0x4, scoped, tag = 'scoped memory for tpu_custom_call.1']
    %8 = vsyncpa [#allocation3], 0
    // Predicated region
    $region2: #{tpu_custom_call.1} parent=1 // pred_check
      _
    $region3: #{tpu_custom_call.1} parent=1 // pred_check_branch
      %10 = sbr.rel (0) target = $region5
    $region4: #{tpu_custom_call.1} parent=1 // pred_region
      _
    $region5: #{tpu_custom_call.1} parent=1 // pred_fallthru
      _
    // Predicated region
    $region6: #{tpu_custom_call.1} parent=1 // pred_check
      _
    $region7: #{tpu_custom_call.1} parent=1 // pred_check_branch
      %12 = sbr.rel (0) target = $region9
    $region8: #{tpu_custom_call.1} parent=1 // pred_region
      _
    $region9: #{tpu_custom_call.1} parent=1 // pred_fallthru
      _
    // Predicated region
    $region10: #{tpu_custom_call.1} parent=1 // pred_check
      _
    $region11: #{tpu_custom_call.1} parent=1 // pred_check_branch
      %14 = sbr.rel (0) target = $region13
    $region12: #{tpu_custom_call.1} parent=1 // pred_region
      _
    $region13: #{tpu_custom_call.1} parent=1 // pred_fallthru
      _
    %v15 = vld [vmem:[%s0] sm:$0xff]
    %v16 = vld [vmem:[%s1] sm:$0xff]
    %v17 = vld [vmem:[%s1 + $0x8] sm:$0xf]
    %v18 = vld [vmem:[%s2] sm:$0x7]
    %v20 = vlaneseq
    %v21 = vshrl.u32 %v20, 7
    %v22 = vsub.s32 0, %v21
    %v23 = vrot.slane %v18, %v22
    %v24 = vlaneseq
    %v25 = vshrl.u32 %v24, 7
    %v26 = vsub.s32 1, %v25
    %v27 = vrot.slane %v18, %v26
    %v28 = vlaneseq
    %v29 = vshrl.u32 %v28, 7
    %v30 = vsub.s32 2, %v29
    %v31 = vrot.slane %v18, %v30
    %v37 = vcombine.high %v16, %v16
    %vm38 = vcmask 31744
    %v40 = vsel %vm38, %v15, 0
    %vm42 = vcmask 1043456
    %v43 = vsel %vm42, %v16, 0
    %v45 = vsel %vm42, %v37, 0
    %v47 = vsel %vm42, %v17, 0
    %49 = vmatprep.subr.mxu0 %v45
    %50 = vmatpush1.msra.mxu0 %v43
    %51 = vmatprep.subr.mxu0 0.0
    %52 = vmatpush1.msra.mxu0 0.0
    %53 = vmatprep.subr.mxu0 0.0
    %54 = vmatpush1.msra.mxu0 0.0
    %55 = vmatprep.subr.mxu0 0.0
    %56 = vmatpush1.msra.mxu0 0.0
    %57 = vmatprep.subr.mxu0 0.0
    %58 = vmatpush1.msra.mxu0 0.0
    %59 = vmatprep.subr.mxu0 0.0
    %60 = vmatpush1.msra.mxu0 0.0
    %61 = vmatprep.subr.mxu0 0.0
    %62 = vmatpush1.msra.mxu0 0.0
    %63 = vmatprep.subr.mxu0 0.0
    %64 = vmatpush1.msra.mxu0 0.0
    %65 = vmatprep.subr.mxu0 0.0
    %66 = vmatpush1.msra.mxu0 0.0
    %67 = vmatprep.subr.mxu0 0.0
    %68 = vmatpush1.msra.mxu0 0.0
    %69 = vmatprep.subr.mxu0 0.0
    %70 = vmatpush1.msra.mxu0 0.0
    %71 = vmatprep.subr.mxu0 0.0
    %72 = vmatpush1.msra.mxu0 0.0
    %73 = vmatprep.subr.mxu0 0.0
    %74 = vmatpush1.msra.mxu0 0.0
    %75 = vmatprep.subr.mxu0 0.0
    %76 = vmatpush1.msra.mxu0 0.0
    %77 = vmatprep.subr.mxu0 0.0
    %78 = vmatpush1.msra.mxu0 0.0
    %79 = vmatprep.subr.mxu0 0.0
    %80 = vmatpush1.msra.mxu0 0.0
    %81 = vmatprep.subr.mxu0 0.0
    %82 = vmatpush1.msra.mxu0 0.0
    %83 = vmatprep.subr.mxu0 0.0
    %84 = vmatpush1.msra.mxu0 0.0
    %85 = vmatprep.subr.mxu0 0.0
    %86 = vmatpush1.msra.mxu0 0.0
    %87 = vmatprep.subr.mxu0 0.0
    %88 = vmatpush1.msra.mxu0 0.0
    %89 = vmatprep.subr.mxu0 0.0
    %90 = vmatpush1.msra.mxu0 0.0
    %91 = vmatprep.subr.mxu0 0.0
    %92 = vmatpush1.msra.mxu0 0.0
    %93 = vmatprep.subr.mxu0 0.0
    %94 = vmatpush1.msra.mxu0 0.0
    %95 = vmatprep.subr.mxu0 0.0
    %96 = vmatpush1.msra.mxu0 0.0
    %97 = vmatprep.subr.mxu0 0.0
    %98 = vmatpush1.msra.mxu0 0.0
    %99 = vmatprep.subr.mxu0 0.0
    %100 = vmatpush1.msra.mxu0 0.0
    %101 = vmatprep.subr.mxu0 0.0
    %102 = vmatpush1.msra.mxu0 0.0
    %103 = vmatprep.subr.mxu0 0.0
    %104 = vmatpush1.msra.mxu0 0.0
    %105 = vmatprep.subr.mxu0 0.0
    %106 = vmatpush1.msra.mxu0 0.0
    %107 = vmatprep.subr.mxu0 0.0
    %108 = vmatpush1.msra.mxu0 0.0
    %109 = vmatprep.subr.mxu0 0.0
    %110 = vmatpush1.msra.mxu0 0.0
    %111 = vmatprep.subr.mxu0 0.0
    %112 = vmatpush1.msra.mxu0 0.0
    %113 = vmatprep.mubr.f32.mxu0 0.0
    %114 = vmatmul.mubr.f32.gmra.mrb[0].mxu0 %v40
    %v115 = vpop.f32.mrb[0].mxu0
    %v116 = vadd.f32 %v23, %v115
    %v117 = vpop.f32.mrb[0].mxu0
    %v118 = vadd.f32 %v27, %v117
    %119 = vdwg.mxu0
    %120 = vmatprep.subr.mxu0 0.0
    %121 = vmatpush1.msra.mxu0 %v47
    %122 = vmatprep.subr.mxu0 0.0
    %123 = vmatpush1.msra.mxu0 0.0
    %124 = vmatprep.subr.mxu0 0.0
    %125 = vmatpush1.msra.mxu0 0.0
    %126 = vmatprep.subr.mxu0 0.0
    %127 = vmatpush1.msra.mxu0 0.0
    %128 = vmatprep.subr.mxu0 0.0
    %129 = vmatpush1.msra.mxu0 0.0
    %130 = vmatprep.subr.mxu0 0.0
    %131 = vmatpush1.msra.mxu0 0.0
    %132 = vmatprep.subr.mxu0 0.0
    %133 = vmatpush1.msra.mxu0 0.0
    %134 = vmatprep.subr.mxu0 0.0
    %135 = vmatpush1.msra.mxu0 0.0
    %136 = vmatprep.subr.mxu0 0.0
    %137 = vmatpush1.msra.mxu0 0.0
    %138 = vmatprep.subr.mxu0 0.0
    %139 = vmatpush1.msra.mxu0 0.0
    %140 = vmatprep.subr.mxu0 0.0
    %141 = vmatpush1.msra.mxu0 0.0
    %142 = vmatprep.subr.mxu0 0.0
    %143 = vmatpush1.msra.mxu0 0.0
    %144 = vmatprep.subr.mxu0 0.0
    %145 = vmatpush1.msra.mxu0 0.0
    %146 = vmatprep.subr.mxu0 0.0
    %147 = vmatpush1.msra.mxu0 0.0
    %148 = vmatprep.subr.mxu0 0.0
    %149 = vmatpush1.msra.mxu0 0.0
    %150 = vmatprep.subr.mxu0 0.0
    %151 = vmatpush1.msra.mxu0 0.0
    %152 = vmatprep.subr.mxu0 0.0
    %153 = vmatpush1.msra.mxu0 0.0
    %154 = vmatprep.subr.mxu0 0.0
    %155 = vmatpush1.msra.mxu0 0.0
    %156 = vmatprep.subr.mxu0 0.0
    %157 = vmatpush1.msra.mxu0 0.0
    %158 = vmatprep.subr.mxu0 0.0
    %159 = vmatpush1.msra.mxu0 0.0
    %160 = vmatprep.subr.mxu0 0.0
    %161 = vmatpush1.msra.mxu0 0.0
    %162 = vmatprep.subr.mxu0 0.0
    %163 = vmatpush1.msra.mxu0 0.0
    %164 = vmatprep.subr.mxu0 0.0
    %165 = vmatpush1.msra.mxu0 0.0
    %166 = vmatprep.subr.mxu0 0.0
    %167 = vmatpush1.msra.mxu0 0.0
    %168 = vmatprep.subr.mxu0 0.0
    %169 = vmatpush1.msra.mxu0 0.0
    %170 = vmatprep.subr.mxu0 0.0
    %171 = vmatpush1.msra.mxu0 0.0
    %172 = vmatprep.subr.mxu0 0.0
    %173 = vmatpush1.msra.mxu0 0.0
    %174 = vmatprep.subr.mxu0 0.0
    %175 = vmatpush1.msra.mxu0 0.0
    %176 = vmatprep.subr.mxu0 0.0
    %177 = vmatpush1.msra.mxu0 0.0
    %178 = vmatprep.subr.mxu0 0.0
    %179 = vmatpush1.msra.mxu0 0.0
    %180 = vmatprep.subr.mxu0 0.0
    %181 = vmatpush1.msra.mxu0 0.0
    %182 = vmatprep.subr.mxu0 0.0
    %183 = vmatpush1.msra.mxu0 0.0
    %184 = vmatprep.mubr.f32.mxu0 0.0
    %185 = vmatmul.mubr.f32.gmra.mrb[0].mxu0 %v40
    %v186 = vpop.f32.mrb[0].mxu0
    %v187 = vadd.f32 %v31, %v186
    %v188 = vpop.f32.mrb[0].mxu0
    %189 = vdwg.mxu0
    %190 = vmatprep.subr.mxu0 0.0
    %191 = vmatpush1.xpose.msra.mxu0 %v116
    %192 = vmatprep.subr.mxu0 0.0
    %193 = vmatpush1.xpose.msra.mxu0 0.0
    %194 = vmatprep.subr.mxu0 0.0
    %195 = vmatpush1.xpose.msra.mxu0 0.0
    %196 = vmatprep.subr.mxu0 0.0
    %197 = vmatpush1.xpose.msra.mxu0 0.0
    %198 = vmatprep.subr.mxu0 0.0
    %199 = vmatpush1.xpose.msra.mxu0 0.0
    %200 = vmatprep.subr.mxu0 0.0
    %201 = vmatpush1.xpose.msra.mxu0 0.0
    %202 = vmatprep.subr.mxu0 0.0
    %203 = vmatpush1.xpose.msra.mxu0 0.0
    %204 = vmatprep.subr.mxu0 0.0
    %205 = vmatpush1.xpose.msra.mxu0 0.0
    %206 = vmatprep.subr.mxu0 0.0
    %207 = vmatpush1.xpose.msra.mxu0 0.0
    %208 = vmatprep.subr.mxu0 0.0
    %209 = vmatpush1.xpose.msra.mxu0 0.0
    %210 = vmatprep.subr.mxu0 0.0
    %211 = vmatpush1.xpose.msra.mxu0 0.0
    %212 = vmatprep.subr.mxu0 0.0
    %213 = vmatpush1.xpose.msra.mxu0 0.0
    %214 = vmatprep.subr.mxu0 0.0
    %215 = vmatpush1.xpose.msra.mxu0 0.0
    %216 = vmatprep.subr.mxu0 0.0
    %217 = vmatpush1.xpose.msra.mxu0 0.0
    %218 = vmatprep.subr.mxu0 0.0
    %219 = vmatpush1.xpose.msra.mxu0 0.0
    %220 = vmatprep.subr.mxu0 0.0
    %221 = vmatpush1.xpose.msra.mxu0 0.0
    %222 = vmatprep.subr.mxu0 0.0
    %223 = vmatpush1.xpose.msra.mxu0 0.0
    %224 = vmatprep.subr.mxu0 0.0
    %225 = vmatpush1.xpose.msra.mxu0 0.0
    %226 = vmatprep.subr.mxu0 0.0
    %227 = vmatpush1.xpose.msra.mxu0 0.0
    %228 = vmatprep.subr.mxu0 0.0
    %229 = vmatpush1.xpose.msra.mxu0 0.0
    %230 = vmatprep.subr.mxu0 0.0
    %231 = vmatpush1.xpose.msra.mxu0 0.0
    %232 = vmatprep.subr.mxu0 0.0
    %233 = vmatpush1.xpose.msra.mxu0 0.0
    %234 = vmatprep.subr.mxu0 0.0
    %235 = vmatpush1.xpose.msra.mxu0 0.0
    %236 = vmatprep.subr.mxu0 0.0
    %237 = vmatpush1.xpose.msra.mxu0 0.0
    %238 = vmatprep.subr.mxu0 0.0
    %239 = vmatpush1.xpose.msra.mxu0 0.0
    %240 = vmatprep.subr.mxu0 0.0
    %241 = vmatpush1.xpose.msra.mxu0 0.0
    %242 = vmatprep.subr.mxu0 0.0
    %243 = vmatpush1.xpose.msra.mxu0 0.0
    %244 = vmatprep.subr.mxu0 0.0
    %245 = vmatpush1.xpose.msra.mxu0 0.0
    %246 = vmatprep.subr.mxu0 0.0
    %247 = vmatpush1.xpose.msra.mxu0 0.0
    %248 = vmatprep.subr.mxu0 0.0
    %249 = vmatpush1.xpose.msra.mxu0 0.0
    %250 = vmatprep.subr.mxu0 0.0
    %251 = vmatpush1.xpose.msra.mxu0 0.0
    %252 = vmatprep.subr.mxu0 0.0
    %253 = vmatpush1.xpose.msra.mxu0 0.0
    %254 = vmatprep.mubr.f32.mxu0 0.0
    %255 = vmatmul.mubr.f32.gmra.mrb[0].mxu0 %v118
    %v256 = vpop.f32.mrb[0].mxu0
    %v257 = vadd.f32 0.0, %v256
    %v258 = vpop.f32.mrb[0].mxu0
    %259 = vdwg.mxu0
    %vm260 = vcmask 64512
    %v261 = vsel %vm260, %v257, -inf
    %262 = vmax.xlane.f32.xlu0 %v261
    %v263 = vpop.xlane.xlu0 %262
    %v264 = vsub.f32 %v257, %v263
    %v265 = vmul.f32 %v264, 1.442695
    %v266 = vpow.pop %v265
    %v267 = vsel %vm260, %v266, 0.0
    %268 = vadd.xlane.f32.xlu0 %v267
    %v269 = vpop.xlane.xlu0 %268
    %v270 = vrcp.pop %v269
    %v271 = vmul.f32 %v266, %v270
    %v273 = vsel %vm260, %v271, 0
    %275 = vmatprep.subr.mxu0 0.0
    %276 = vmatpush1.msra.mxu0 %v187
    %277 = vmatprep.subr.mxu0 0.0
    %278 = vmatpush1.msra.mxu0 0.0
    %279 = vmatprep.subr.mxu0 0.0
    %280 = vmatpush1.msra.mxu0 0.0
    %281 = vmatprep.subr.mxu0 0.0
    %282 = vmatpush1.msra.mxu0 0.0
    %283 = vmatprep.subr.mxu0 0.0
    %284 = vmatpush1.msra.mxu0 0.0
    %285 = vmatprep.subr.mxu0 0.0
    %286 = vmatpush1.msra.mxu0 0.0
    %287 = vmatprep.subr.mxu0 0.0
    %288 = vmatpush1.msra.mxu0 0.0
    %289 = vmatprep.subr.mxu0 0.0
    %290 = vmatpush1.msra.mxu0 0.0
    %291 = vmatprep.subr.mxu0 0.0
    %292 = vmatpush1.msra.mxu0 0.0
    %293 = vmatprep.subr.mxu0 0.0
    %294 = vmatpush1.msra.mxu0 0.0
    %295 = vmatprep.subr.mxu0 0.0
    %296 = vmatpush1.msra.mxu0 0.0
    %297 = vmatprep.subr.mxu0 0.0
    %298 = vmatpush1.msra.mxu0 0.0
    %299 = vmatprep.subr.mxu0 0.0
    %300 = vmatpush1.msra.mxu0 0.0
    %301 = vmatprep.subr.mxu0 0.0
    %302 = vmatpush1.msra.mxu0 0.0
    %303 = vmatprep.subr.mxu0 0.0
    %304 = vmatpush1.msra.mxu0 0.0
    %305 = vmatprep.subr.mxu0 0.0
    %306 = vmatpush1.msra.mxu0 0.0
    %307 = vmatprep.subr.mxu0 0.0
    %308 = vmatpush1.msra.mxu0 0.0
    %309 = vmatprep.subr.mxu0 0.0
    %310 = vmatpush1.msra.mxu0 0.0
    %311 = vmatprep.subr.mxu0 0.0
    %312 = vmatpush1.msra.mxu0 0.0
    %313 = vmatprep.subr.mxu0 0.0
    %314 = vmatpush1.msra.mxu0 0.0
    %315 = vmatprep.subr.mxu0 0.0
    %316 = vmatpush1.msra.mxu0 0.0
    %317 = vmatprep.subr.mxu0 0.0
    %318 = vmatpush1.msra.mxu0 0.0
    %319 = vmatprep.subr.mxu0 0.0
    %320 = vmatpush1.msra.mxu0 0.0
    %321 = vmatprep.subr.mxu0 0.0
    %322 = vmatpush1.msra.mxu0 0.0
    %323 = vmatprep.subr.mxu0 0.0
    %324 = vmatpush1.msra.mxu0 0.0
    %325 = vmatprep.subr.mxu0 0.0
    %326 = vmatpush1.msra.mxu0 0.0
    %327 = vmatprep.subr.mxu0 0.0
    %328 = vmatpush1.msra.mxu0 0.0
    %329 = vmatprep.subr.mxu0 0.0
    %330 = vmatpush1.msra.mxu0 0.0
    %331 = vmatprep.subr.mxu0 0.0
    %332 = vmatpush1.msra.mxu0 0.0
    %333 = vmatprep.subr.mxu0 0.0
    %334 = vmatpush1.msra.mxu0 0.0
    %335 = vmatprep.subr.mxu0 0.0
    %336 = vmatpush1.msra.mxu0 0.0
    %337 = vmatprep.subr.mxu0 0.0
    %338 = vmatpush1.msra.mxu0 0.0
    %339 = vmatprep.mubr.f32.mxu0 0.0
    %340 = vmatmul.mubr.f32.gmra.mrb[0].mxu0 %v273
    %v341 = vpop.f32.mrb[0].mxu0
    %v342 = vadd.f32 0.0, %v341
    %v343 = vpop.f32.mrb[0].mxu0
    %344 = vdwg.mxu0
    %345 = vst [vmem:[#allocation2] sm:$0xff] %v342
    // Predicated region
    $region14: #{tpu_custom_call.1} parent=1 // pred_check
      _
    $region15: #{tpu_custom_call.1} parent=1 // pred_check_branch
      %347 = sbr.rel (0) target = $region17
    $region16: #{tpu_custom_call.1} parent=1 // pred_region
      %s349 = ssub.s32 128, 128
      %350 = vsyncadd [#allocation3], %s349
      %s352 = sshll.u32 [#allocation2], 4
      %s353 = int_to_ptr.vmem [resolvable:$true] %s352
      %355 = dma.vmem_to_hbm [thread:$0]  %s353, 128, %s3, [#allocation3]
    $region17: #{tpu_custom_call.1} parent=1 // pred_fallthru
      _
    // Predicated region
    $region18: #{tpu_custom_call.1} parent=1 // pred_check
      _
    $region19: #{tpu_custom_call.1} parent=1 // pred_check_branch
      %357 = sbr.rel (0) target = $region21
    $region20: #{tpu_custom_call.1} parent=1 // pred_region
      %358 = dma.done [#allocation3], 128
    $region21: #{tpu_custom_call.1} parent=1 // pred_fallthru
      _
    %359 = vsyncpa [#allocation3], 1

</llo_original>
